<compile_context>
chip_gen: v6e
topology: v6e:2x2x1
jax: 0.10.0
libtpu: 0.0.40
codegen_flags: <defaults>
</compile_context>

<pallas_src>
import functools

import jax
import jax.numpy as jnp
from jax import lax
from jax.experimental import pallas as pl
from jax.experimental.pallas import tpu as pltpu


# ----------------------------- Fused edge-score kernel -----------------------------

def _edge_score_kernel(src_ref, dst_ref, ht_ref, o_ref, *, normalize):
    """Scores one block of `te` edges.

    src_ref, dst_ref : (1, te)     int32 edge endpoints (VMEM)
    ht_ref           : (D, n_pad)  float32 transposed node features, VMEM-resident
    o_ref            : (1, te)     float32 lane-dense scores for this block
    """
    n_pad = ht_ref.shape[1]
    te = src_ref.shape[1]

    # One-hot selection matrices: onehot[j, i] = (j == idx[i]).
    node_ids = lax.broadcasted_iota(jnp.int32, (n_pad, te), 0)
    onehot_src = (node_ids == src_ref[...]).astype(jnp.float32)      # (n_pad, te)
    onehot_dst = (node_ids == dst_ref[...]).astype(jnp.float32)      # (n_pad, te)

    # MXU gather: u_t[d, i] = h[src[i], d]  (features on sublanes, edges on lanes).
    u_t = jnp.dot(ht_ref[...], onehot_src, preferred_element_type=jnp.float32)
    v_t = jnp.dot(ht_ref[...], onehot_dst, preferred_element_type=jnp.float32)

    if normalize:
        u_t = jnp.maximum(u_t, 0.0) + 1e-6
        v_t = jnp.maximum(v_t, 0.0) + 1e-6
        dot_uv = jnp.sum(u_t * v_t, axis=0, keepdims=True)           # (1, te)
        ss_u = jnp.sum(u_t * u_t, axis=0, keepdims=True)
        ss_v = jnp.sum(v_t * v_t, axis=0, keepdims=True)
        # score = <u, v> / (||u|| * ||v||); the torch 1e-12 clamp can never
        # trigger because every component is >= 1e-6.  rsqrt goes to the EUP.
        o_ref[...] = dot_uv * lax.rsqrt(ss_u) * lax.rsqrt(ss_v)
    else:
        o_ref[...] = jnp.sum(u_t * v_t, axis=0, keepdims=True)


# ----------------------------- Wrapper -----------------------------

def _round_up(x, m):
    return (x + m - 1) // m * m


def _vmem_limit_bytes(d, n_pad, te):
    # Resident node table (conservatively x2 for pipeline buffering) +
    # one-hot matrices + gathered feature temporaries + slack.  Floor at 32 MiB
    # (v5e's scoped default is only 16 MiB), cap at 48 MiB (safe on v7x's
    # 64 MiB physical VMEM).
    est = 2 * d * n_pad * 4 + 2 * n_pad * te * 4 + 4 * d * te * 4 + (4 << 20)
    return int(min(48 << 20, max(32 << 20, est)))


def dot_product_prediction_head(h, src, dst, *, dp_normalize_output=True):
    """Forward pass of DotProductPredictionHead.

    h:   [N, D] float node features
    src: [E] int32 edge source node indices
    dst: [E] int32 edge destination node indices
    returns: [E] float32 edge scores
    """
    n, d = h.shape
    e = src.shape[0]

    # Single host-side prep op: transpose + lane-pad the node table so node
    # ids sit on the lane axis (multiple of 128).  Padded columns are zero and
    # are never selected by any one-hot (all indices < n).
    n_pad = _round_up(max(n, 1), 128)
    h_t = jnp.zeros((d, n_pad), jnp.float32).at[:, :n].set(h.astype(jnp.float32).T)

    # Edge-block size: big blocks amortize the ~0.35us per-grid-step overhead;
    # for small graphs just use one block.
    if e <= 512:
        te = _round_up(max(e, 1), 128)
        e_pad = te
    else:
        te = 512
        e_pad = _round_up(e, te)

    # Edge indices as lane-major rows; padded edges point at node 0 and their
    # scores are sliced away below.
    src_row = jnp.zeros((1, e_pad), jnp.int32).at[0, :e].set(src.astype(jnp.int32))
    dst_row = jnp.zeros((1, e_pad), jnp.int32).at[0, :e].set(dst.astype(jnp.int32))

    kernel = functools.partial(_edge_score_kernel, normalize=dp_normalize_output)

    out = pl.pallas_call(
        kernel,
        out_shape=jax.ShapeDtypeStruct((1, e_pad), jnp.float32),
        grid=(e_pad // te,),
        in_specs=[
            pl.BlockSpec((1, te), lambda i: (0, i)),          # src indices
            pl.BlockSpec((1, te), lambda i: (0, i)),          # dst indices
            pl.BlockSpec((d, n_pad), lambda i: (0, 0)),       # resident node table
        ],
        out_specs=pl.BlockSpec((1, te), lambda i: (0, i)),    # lane-dense scores
        compiler_params=pltpu.CompilerParams(
            dimension_semantics=("parallel",),
            vmem_limit_bytes=_vmem_limit_bytes(d, n_pad, te)),
    )(src_row, dst_row, h_t)

    return out[0, :e]


# ----------------------------- Pure-JAX reference -----------------------------

def _ref_forward(h, src, dst, dp_normalize_output=True):
    h = h.astype(jnp.float32)
    if dp_normalize_output:
        y = jnp.maximum(h, 0.0) + 1e-6
        nrm = jnp.maximum(jnp.sqrt(jnp.sum(y * y, axis=1, keepdims=True)), 1e-12)
        y = y / nrm
    else:
        y = h
    return jnp.sum(y[src] * y[dst], axis=1)


# ----------------------------- Main -----------------------------

if __name__ == "__main__":
    key = jax.random.PRNGKey(0)
    k_h, k_src, k_dst = jax.random.split(key, 3)

    N, D, E = 12, 32, 20  # small graph: 12 nodes, 32-dim features, 20 edges
    h = jax.random.normal(k_h, (N, D), dtype=jnp.float32)
    src = jax.random.randint(k_src, (E,), 0, N, dtype=jnp.int32)
    dst = jax.random.randint(k_dst, (E,), 0, N, dtype=jnp.int32)

    scores = dot_product_prediction_head(h, src, dst, dp_normalize_output=True)
    scores = jax.block_until_ready(scores)

    ref = _ref_forward(h, src, dst, dp_normalize_output=True)
    assert scores.shape == (E,)
    # Tolerance allows for the MXU's f32 pass decomposition of the gather
    # matmul (operand rounding at ~bf16 granularity in the worst case).
    assert jnp.allclose(scores, ref, rtol=1e-2, atol=5e-3), (scores, ref)

    print("KERNEL_OK")
</pallas_src>

<mosaic_0001>
module attributes {stable_mosaic.version = 11 : i64} {
  func.func @_edge_score_kernel(%arg0: i32, %arg1: memref<1x128xi32, #tpu.memory_space<vmem>>, %arg2: memref<1x128xi32, #tpu.memory_space<vmem>>, %arg3: memref<32x128xf32, #tpu.memory_space<vmem>>, %arg4: memref<1x128xf32, #tpu.memory_space<vmem>>) attributes {dimension_semantics = [#tpu.dimension_semantics<parallel>], iteration_bounds = array<i64: 1>, scalar_prefetch = 0 : i64, scratch_operands = 0 : i64, tpu.core_type = #tpu.core_type<tc>, window_params = [{transform_indices = @transform_0, window_bounds = array<i64: 1, 128>}, {transform_indices = @transform_1, window_bounds = array<i64: 1, 128>}, {pipeline_mode = #tpu.pipeline_mode<synchronous>, transform_indices = @transform_2, window_bounds = array<i64: 32, 128>}, {transform_indices = @transform_3, window_bounds = array<i64: 1, 128>}]} {
    %0 = tpu.iota {dimensions = array<i32: 0>} : vector<128x128xi32>
    %c0 = arith.constant 0 : index
    %c0_0 = arith.constant 0 : index
    %1 = vector.load %arg1[%c0, %c0_0] : memref<1x128xi32, #tpu.memory_space<vmem>>, vector<1x128xi32>
    %2 = vector.broadcast %1 : vector<1x128xi32> to vector<128x128xi32>
    %3 = arith.cmpi eq, %0, %2 : vector<128x128xi32>
    %4 = arith.extui %3 : vector<128x128xi1> to vector<128x128xi32>
    %5 = arith.sitofp %4 : vector<128x128xi32> to vector<128x128xf32>
    %c0_1 = arith.constant 0 : index
    %c0_2 = arith.constant 0 : index
    %6 = vector.load %arg2[%c0_1, %c0_2] : memref<1x128xi32, #tpu.memory_space<vmem>>, vector<1x128xi32>
    %7 = vector.broadcast %6 : vector<1x128xi32> to vector<128x128xi32>
    %8 = arith.cmpi eq, %0, %7 : vector<128x128xi32>
    %9 = arith.extui %8 : vector<128x128xi1> to vector<128x128xi32>
    %10 = arith.sitofp %9 : vector<128x128xi32> to vector<128x128xf32>
    %c0_3 = arith.constant 0 : index
    %c0_4 = arith.constant 0 : index
    %11 = vector.load %arg3[%c0_3, %c0_4] : memref<32x128xf32, #tpu.memory_space<vmem>>, vector<32x128xf32>
    %cst = arith.constant dense<0.000000e+00> : vector<32x128xf32>
    %12 = tpu.matmul %11, %5, %cst {dimension_numbers = #tpu.dot_dimension_numbers<[1], [0], [0], [1], [0, 0, 1, 1], [], []>} : vector<32x128xf32>, vector<128x128xf32>, vector<32x128xf32> -> vector<32x128xf32>
    %c0_5 = arith.constant 0 : index
    %c0_6 = arith.constant 0 : index
    %13 = vector.load %arg3[%c0_5, %c0_6] : memref<32x128xf32, #tpu.memory_space<vmem>>, vector<32x128xf32>
    %cst_7 = arith.constant dense<0.000000e+00> : vector<32x128xf32>
    %14 = tpu.matmul %13, %10, %cst_7 {dimension_numbers = #tpu.dot_dimension_numbers<[1], [0], [0], [1], [0, 0, 1, 1], [], []>} : vector<32x128xf32>, vector<128x128xf32>, vector<32x128xf32> -> vector<32x128xf32>
    %cst_8 = arith.constant 0.000000e+00 : f32
    %15 = vector.broadcast %cst_8 : f32 to vector<32x128xf32>
    %16 = arith.maximumf %12, %15 : vector<32x128xf32>
    %cst_9 = arith.constant 9.99999997E-7 : f32
    %17 = vector.broadcast %cst_9 : f32 to vector<32x128xf32>
    %18 = arith.addf %16, %17 : vector<32x128xf32>
    %cst_10 = arith.constant 0.000000e+00 : f32
    %19 = vector.broadcast %cst_10 : f32 to vector<32x128xf32>
    %20 = arith.maximumf %14, %19 : vector<32x128xf32>
    %cst_11 = arith.constant 9.99999997E-7 : f32
    %21 = vector.broadcast %cst_11 : f32 to vector<32x128xf32>
    %22 = arith.addf %20, %21 : vector<32x128xf32>
    %23 = arith.mulf %18, %22 : vector<32x128xf32>
    %cst_12 = arith.constant dense<0.000000e+00> : vector<128xf32>
    %24 = vector.multi_reduction <add>, %23, %cst_12 [0] : vector<32x128xf32> to vector<128xf32>
    %25 = vector.shape_cast %24 : vector<128xf32> to vector<1x128xf32>
    %26 = arith.mulf %18, %18 : vector<32x128xf32>
    %cst_13 = arith.constant dense<0.000000e+00> : vector<128xf32>
    %27 = vector.multi_reduction <add>, %26, %cst_13 [0] : vector<32x128xf32> to vector<128xf32>
    %28 = vector.shape_cast %27 : vector<128xf32> to vector<1x128xf32>
    %29 = arith.mulf %22, %22 : vector<32x128xf32>
    %cst_14 = arith.constant dense<0.000000e+00> : vector<128xf32>
    %30 = vector.multi_reduction <add>, %29, %cst_14 [0] : vector<32x128xf32> to vector<128xf32>
    %31 = vector.shape_cast %30 : vector<128xf32> to vector<1x128xf32>
    %32 = math.rsqrt %28 : vector<1x128xf32>
    %33 = arith.mulf %25, %32 : vector<1x128xf32>
    %34 = math.rsqrt %31 : vector<1x128xf32>
    %35 = arith.mulf %33, %34 : vector<1x128xf32>
    %c0_15 = arith.constant 0 : index
    %c0_16 = arith.constant 0 : index
    %36 = vector.load %arg4[%c0_15, %c0_16] : memref<1x128xf32, #tpu.memory_space<vmem>>, vector<1x128xf32>
    tpu.vector_store %arg4[%c0_15, %c0_16], %35 {strides = array<i32>} : memref<1x128xf32, #tpu.memory_space<vmem>>, vector<1x128xf32>,
    return
  }
  func.func @transform_0(%arg0: i32) -> (i32, i32) {
    %c0_i32 = arith.constant 0 : i32
    %c0_i32_0 = arith.constant 0 : i32
    return %c0_i32, %arg0 : i32, i32
  }
  func.func @transform_1(%arg0: i32) -> (i32, i32) {
    %c0_i32 = arith.constant 0 : i32
    %c0_i32_0 = arith.constant 0 : i32
    return %c0_i32, %arg0 : i32, i32
  }
  func.func @transform_2(%arg0: i32) -> (i32, i32) {
    %c0_i32 = arith.constant 0 : i32
    %c0_i32_0 = arith.constant 0 : i32
    %c0_i32_1 = arith.constant 0 : i32
    return %c0_i32, %c0_i32_0 : i32, i32
  }
  func.func @transform_3(%arg0: i32) -> (i32, i32) {
    %c0_i32 = arith.constant 0 : i32
    %c0_i32_0 = arith.constant 0 : i32
    return %c0_i32, %arg0 : i32, i32
  }
}

</mosaic_0001>

<llo_original>
// kernel: tpu_custom_call.1
$region0: #{tpu_custom_call.1}
  #allocation0 [shape = 'u32[]', space=smem, size = 0x4, offset = 0x4, fixed_abs, tag = 'smem constant byte address 0x4 - core index']
  #allocation1 [shape = 'u32[144,128]{1,0:T(1,128)}', space=vmem, size = 0x12000, scoped, tag = 'internal scratch']
  %s0 = inlined_call_operand.hbm [shape: s32[1,128], index: 0, kind: input, shape index: {}]
  %s1 = inlined_call_operand.vmem [shape: s32[1,128], index: 1, kind: input, shape index: {}]
  %s2 = inlined_call_operand.hbm [shape: f32[32,128], index: 2, kind: input, shape index: {}]
  %s3 = inlined_call_operand.hbm [shape: f32[1,128], index: 3, kind: output, shape index: {}]
  %s4 = sld [smem:[#allocation0]]
  $region30: #{tpu_custom_call.1} parent=0
    _
  %s6 = ssub.s32 1, %s4
  %s7 = scalar_select 0, %s6, %s4
  $region1: #{tpu_custom_call.1} parent=0
    #allocation2 [shape = 'u8[512]{0}', space=vmem, size = 0x400, scoped, tag = 'input window, operand 0, single buffered']
    #allocation3 [shape = 's32[1]{0}', space=sflag, size = 0x4, scoped, tag = 'scoped memory for tpu_custom_call.1']
    #allocation4 [shape = 's32[1]{0}', space=sflag, size = 0x4, scoped, tag = 'scoped memory for tpu_custom_call.1']
    #allocation5 [shape = 'u8[16384]{0}', space=vmem, size = 0x4000, scoped, tag = 'input window, operand 2, single buffered']
    #allocation6 [shape = 's32[1]{0}', space=sflag, size = 0x4, scoped, tag = 'scoped memory for tpu_custom_call.1']
    #allocation7 [shape = 'u8[512]{0}', space=vmem, size = 0x400, scoped, tag = 'output window, operand 0, single buffered']
    %8 = vsyncpa [#allocation3], 0
    %9 = vsyncpa [#allocation6], 0
    %10 = vsyncpa [#allocation4], 0
    // Predicated region
    $region2: #{tpu_custom_call.1} parent=1 // pred_check
      _
    $region3: #{tpu_custom_call.1} parent=1 // pred_check_branch
      %12 = sbr.rel (0) target = $region5
    $region4: #{tpu_custom_call.1} parent=1 // pred_region
      %s14 = ssub.s32 16, 16
      %15 = vsyncadd [#allocation3], %s14
      %s17 = sshll.u32 [#allocation2], 4
      %s18 = int_to_ptr.vmem [resolvable:$true] %s17
      %20 = dma.hbm_to_vmem [thread:$0]  %s0, 16, %s18, [#allocation3]
    $region5: #{tpu_custom_call.1} parent=1 // pred_fallthru
      _
    // Predicated region
    $region6: #{tpu_custom_call.1} parent=1 // pred_check
      _
    $region7: #{tpu_custom_call.1} parent=1 // pred_check_branch
      %22 = sbr.rel (0) target = $region9
    $region8: #{tpu_custom_call.1} parent=1 // pred_region
      _
    $region9: #{tpu_custom_call.1} parent=1 // pred_fallthru
      _
    // Predicated region
    $region10: #{tpu_custom_call.1} parent=1 // pred_check
      _
    $region11: #{tpu_custom_call.1} parent=1 // pred_check_branch
      %24 = sbr.rel (0) target = $region13
    $region12: #{tpu_custom_call.1} parent=1 // pred_region
      %s26 = ssub.s32 512, 512
      %27 = vsyncadd [#allocation6], %s26
      %s28 = sshll.u32 [#allocation5], 4
      %s29 = int_to_ptr.vmem [resolvable:$true] %s28
      %34 = dma.hbm_to_vmem [thread:$0]  %s2, 512, %s29, [#allocation6], 128, 128, 8
    $region13: #{tpu_custom_call.1} parent=1 // pred_fallthru
      _
    // Predicated region
    $region14: #{tpu_custom_call.1} parent=1 // pred_check
      _
    $region15: #{tpu_custom_call.1} parent=1 // pred_check_branch
      %36 = sbr.rel (0) target = $region17
    $region16: #{tpu_custom_call.1} parent=1 // pred_region
      %37 = dma.done [#allocation3], 16
    $region17: #{tpu_custom_call.1} parent=1 // pred_fallthru
      _
    // Predicated region
    $region18: #{tpu_custom_call.1} parent=1 // pred_check
      _
    $region19: #{tpu_custom_call.1} parent=1 // pred_check_branch
      %39 = sbr.rel (0) target = $region21
    $region20: #{tpu_custom_call.1} parent=1 // pred_region
      %40 = dma.done [#allocation6], 512
    $region21: #{tpu_custom_call.1} parent=1 // pred_fallthru
      _
    %v41 = vlaneseq
    %v42 = vshrl.u32 %v41, 7
    %v43 = vadd.s32 %v42, 8
    %v44 = vadd.s32 %v42, 16
    %v45 = vadd.s32 %v42, 24
    %v46 = vadd.s32 %v42, 32
    %v47 = vadd.s32 %v42, 40
    %v48 = vadd.s32 %v42, 48
    %v49 = vadd.s32 %v42, 56
    %v50 = vadd.s32 %v42, 64
    %v51 = vadd.s32 %v42, 72
    %v52 = vadd.s32 %v42, 80
    %v53 = vadd.s32 %v42, 88
    %v54 = vadd.s32 %v42, 96
    %v55 = vadd.s32 %v42, 104
    %v56 = vadd.s32 %v42, 112
    %v57 = vadd.s32 %v42, 120
    %v58 = vld [vmem:[#allocation2] sm:$0x1]
    %v59 = vlaneseq
    %v60 = vshrl.u32 %v59, 7
    %v61 = vsub.s32 0, %v60
    %v62 = vrot.slane %v58, %v61
    %vm63 = vcmp.eq.s32.totalorder %v42, %v62
    %vm64 = vcmp.eq.s32.totalorder %v43, %v62
    %vm65 = vcmp.eq.s32.totalorder %v44, %v62
    %vm66 = vcmp.eq.s32.totalorder %v45, %v62
    %vm67 = vcmp.eq.s32.totalorder %v46, %v62
    %vm68 = vcmp.eq.s32.totalorder %v47, %v62
    %vm69 = vcmp.eq.s32.totalorder %v48, %v62
    %vm70 = vcmp.eq.s32.totalorder %v49, %v62
    %vm71 = vcmp.eq.s32.totalorder %v50, %v62
    %vm72 = vcmp.eq.s32.totalorder %v51, %v62
    %vm73 = vcmp.eq.s32.totalorder %v52, %v62
    %vm74 = vcmp.eq.s32.totalorder %v53, %v62
    %vm75 = vcmp.eq.s32.totalorder %v54, %v62
    %vm76 = vcmp.eq.s32.totalorder %v55, %v62
    %vm77 = vcmp.eq.s32.totalorder %v56, %v62
    %vm78 = vcmp.eq.s32.totalorder %v57, %v62
    %v79 = vsel %vm63, 1, 0
    %v80 = vsel %vm64, 1, 0
    %v81 = vsel %vm65, 1, 0
    %v82 = vsel %vm66, 1, 0
    %v83 = vsel %vm67, 1, 0
    %v84 = vsel %vm68, 1, 0
    %v85 = vsel %vm69, 1, 0
    %v86 = vsel %vm70, 1, 0
    %v87 = vsel %vm71, 1, 0
    %v88 = vsel %vm72, 1, 0
    %v89 = vsel %vm73, 1, 0
    %v90 = vsel %vm74, 1, 0
    %v91 = vsel %vm75, 1, 0
    %v92 = vsel %vm76, 1, 0
    %v93 = vsel %vm77, 1, 0
    %v94 = vsel %vm78, 1, 0
    %v95 = vcvt.s32.f32 %v79
    %v96 = vcvt.s32.f32 %v80
    %v97 = vcvt.s32.f32 %v81
    %v98 = vcvt.s32.f32 %v82
    %v99 = vcvt.s32.f32 %v83
    %v100 = vcvt.s32.f32 %v84
    %v101 = vcvt.s32.f32 %v85
    %v102 = vcvt.s32.f32 %v86
    %v103 = vcvt.s32.f32 %v87
    %v104 = vcvt.s32.f32 %v88
    %v105 = vcvt.s32.f32 %v89
    %v106 = vcvt.s32.f32 %v90
    %v107 = vcvt.s32.f32 %v91
    %v108 = vcvt.s32.f32 %v92
    %v109 = vcvt.s32.f32 %v93
    %v110 = vcvt.s32.f32 %v94
    %v111 = vld [vmem:[%s1] sm:$0x1]
    %v112 = vlaneseq
    %v113 = vshrl.u32 %v112, 7
    %v114 = vsub.s32 0, %v113
    %v115 = vrot.slane %v111, %v114
    %vm116 = vcmp.eq.s32.totalorder %v42, %v115
    %vm117 = vcmp.eq.s32.totalorder %v43, %v115
    %vm118 = vcmp.eq.s32.totalorder %v44, %v115
    %vm119 = vcmp.eq.s32.totalorder %v45, %v115
    %vm120 = vcmp.eq.s32.totalorder %v46, %v115
    %vm121 = vcmp.eq.s32.totalorder %v47, %v115
    %vm122 = vcmp.eq.s32.totalorder %v48, %v115
    %vm123 = vcmp.eq.s32.totalorder %v49, %v115
    %vm124 = vcmp.eq.s32.totalorder %v50, %v115
    %vm125 = vcmp.eq.s32.totalorder %v51, %v115
    %vm126 = vcmp.eq.s32.totalorder %v52, %v115
    %vm127 = vcmp.eq.s32.totalorder %v53, %v115
    %vm128 = vcmp.eq.s32.totalorder %v54, %v115
    %vm129 = vcmp.eq.s32.totalorder %v55, %v115
    %vm130 = vcmp.eq.s32.totalorder %v56, %v115
    %vm131 = vcmp.eq.s32.totalorder %v57, %v115
    %v132 = vsel %vm116, 1, 0
    %v133 = vsel %vm117, 1, 0
    %v134 = vsel %vm118, 1, 0
    %v135 = vsel %vm119, 1, 0
    %v136 = vsel %vm120, 1, 0
    %v137 = vsel %vm121, 1, 0
    %v138 = vsel %vm122, 1, 0
    %v139 = vsel %vm123, 1, 0
    %v140 = vsel %vm124, 1, 0
    %v141 = vsel %vm125, 1, 0
    %v142 = vsel %vm126, 1, 0
    %v143 = vsel %vm127, 1, 0
    %v144 = vsel %vm128, 1, 0
    %v145 = vsel %vm129, 1, 0
    %v146 = vsel %vm130, 1, 0
    %v147 = vsel %vm131, 1, 0
    %v148 = vcvt.s32.f32 %v132
    %v149 = vcvt.s32.f32 %v133
    %v150 = vcvt.s32.f32 %v134
    %v151 = vcvt.s32.f32 %v135
    %v152 = vcvt.s32.f32 %v136
    %v153 = vcvt.s32.f32 %v137
    %v154 = vcvt.s32.f32 %v138
    %v155 = vcvt.s32.f32 %v139
    %v156 = vcvt.s32.f32 %v140
    %v157 = vcvt.s32.f32 %v141
    %v158 = vcvt.s32.f32 %v142
    %v159 = vcvt.s32.f32 %v143
    %v160 = vcvt.s32.f32 %v144
    %v161 = vcvt.s32.f32 %v145
    %v162 = vcvt.s32.f32 %v146
    %v163 = vcvt.s32.f32 %v147
    %v164 = vld [vmem:[#allocation5] sm:$0xff]
    %v165 = vld [vmem:[#allocation5 + $0x8] sm:$0xff]
    %v166 = vld [vmem:[#allocation5 + $0x10] sm:$0xff]
    %v167 = vld [vmem:[#allocation5 + $0x18] sm:$0xff]
    %168 = vmatprep.subr.mxu0 0.0
    %169 = vmatpush1.msra.mxu0 %v110
    %170 = vmatprep.subr.mxu0 0.0
    %171 = vmatpush1.msra.mxu0 %v109
    %172 = vmatprep.subr.mxu0 0.0
    %173 = vmatpush1.msra.mxu0 %v108
    %174 = vmatprep.subr.mxu0 0.0
    %175 = vmatpush1.msra.mxu0 %v107
    %176 = vmatprep.subr.mxu0 0.0
    %177 = vmatpush1.msra.mxu0 %v106
    %178 = vmatprep.subr.mxu0 0.0
    %179 = vmatpush1.msra.mxu0 %v105
    %180 = vmatprep.subr.mxu0 0.0
    %181 = vmatpush1.msra.mxu0 %v104
    %182 = vmatprep.subr.mxu0 0.0
    %183 = vmatpush1.msra.mxu0 %v103
    %184 = vmatprep.subr.mxu0 0.0
    %185 = vmatpush1.msra.mxu0 %v102
    %186 = vmatprep.subr.mxu0 0.0
    %187 = vmatpush1.msra.mxu0 %v101
    %188 = vmatprep.subr.mxu0 0.0
    %189 = vmatpush1.msra.mxu0 %v100
    %190 = vmatprep.subr.mxu0 0.0
    %191 = vmatpush1.msra.mxu0 %v99
    %192 = vmatprep.subr.mxu0 0.0
    %193 = vmatpush1.msra.mxu0 %v98
    %194 = vmatprep.subr.mxu0 0.0
    %195 = vmatpush1.msra.mxu0 %v97
    %196 = vmatprep.subr.mxu0 0.0
    %197 = vmatpush1.msra.mxu0 %v96
    %198 = vmatprep.subr.mxu0 0.0
    %199 = vmatpush1.msra.mxu0 %v95
    %200 = vmatprep.subr.mxu0 0.0
    %201 = vmatpush2.msra.mxu0 0.0
    %202 = vmatprep.subr.mxu0 0.0
    %203 = vmatpush2.msra.mxu0 0.0
    %204 = vmatprep.subr.mxu0 0.0
    %205 = vmatpush2.msra.mxu0 0.0
    %206 = vmatprep.subr.mxu0 0.0
    %207 = vmatpush2.msra.mxu0 0.0
    %208 = vmatprep.subr.mxu0 0.0
    %209 = vmatpush2.msra.mxu0 0.0
    %210 = vmatprep.subr.mxu0 0.0
    %211 = vmatpush2.msra.mxu0 0.0
    %212 = vmatprep.subr.mxu0 0.0
    %213 = vmatpush2.msra.mxu0 0.0
    %214 = vmatprep.subr.mxu0 0.0
    %215 = vmatpush2.msra.mxu0 0.0
    %216 = vmatprep.subr.mxu0 0.0
    %217 = vmatpush2.msra.mxu0 0.0
    %218 = vmatprep.subr.mxu0 0.0
    %219 = vmatpush2.msra.mxu0 0.0
    %220 = vmatprep.subr.mxu0 0.0
    %221 = vmatpush2.msra.mxu0 0.0
    %222 = vmatprep.subr.mxu0 0.0
    %223 = vmatpush2.msra.mxu0 0.0
    %224 = vmatprep.subr.mxu0 0.0
    %225 = vmatpush2.msra.mxu0 0.0
    %226 = vmatprep.subr.mxu0 0.0
    %227 = vmatpush2.msra.mxu0 0.0
    %228 = vmatprep.subr.mxu0 0.0
    %229 = vmatpush2.msra.mxu0 0.0
    %230 = vmatprep.subr.mxu0 0.0
    %231 = vmatpush2.msra.mxu0 0.0
    %232 = vmatprep.mubr.f32.mxu0 0.0
    %233 = vmatmul.mubr.f32.gmra.mxu0 %v164
    %v234 = vpop.f32.mrf.mxu0
    %v235 = vadd.f32 0.0, %v234
    %v236 = vpop.f32.mrf.mxu0
    %237 = vmatprep.mubr.f32.mxu0 0.0
    %238 = vmatmul.mubr.f32.gmra.mxu0 %v165
    %v239 = vpop.f32.mrf.mxu0
    %v240 = vadd.f32 0.0, %v239
    %v241 = vpop.f32.mrf.mxu0
    %242 = vmatprep.mubr.f32.mxu0 0.0
    %243 = vmatmul.mubr.f32.gmra.mxu0 %v166
    %v244 = vpop.f32.mrf.mxu0
    %v245 = vadd.f32 0.0, %v244
    %v246 = vpop.f32.mrf.mxu0
    %247 = vmatprep.mubr.f32.mxu0 0.0
    %248 = vmatmul.mubr.f32.gmra.mxu0 %v167
    %v249 = vpop.f32.mrf.mxu0
    %v250 = vadd.f32 0.0, %v249
    %v251 = vpop.f32.mrf.mxu0
    %252 = vdwg.mxu0
    %253 = vmatprep.subr.mxu0 0.0
    %254 = vmatpush1.msra.mxu0 %v163
    %255 = vmatprep.subr.mxu0 0.0
    %256 = vmatpush1.msra.mxu0 %v162
    %257 = vmatprep.subr.mxu0 0.0
    %258 = vmatpush1.msra.mxu0 %v161
    %259 = vmatprep.subr.mxu0 0.0
    %260 = vmatpush1.msra.mxu0 %v160
    %261 = vmatprep.subr.mxu0 0.0
    %262 = vmatpush1.msra.mxu0 %v159
    %263 = vmatprep.subr.mxu0 0.0
    %264 = vmatpush1.msra.mxu0 %v158
    %265 = vmatprep.subr.mxu0 0.0
    %266 = vmatpush1.msra.mxu0 %v157
    %267 = vmatprep.subr.mxu0 0.0
    %268 = vmatpush1.msra.mxu0 %v156
    %269 = vmatprep.subr.mxu0 0.0
    %270 = vmatpush1.msra.mxu0 %v155
    %271 = vmatprep.subr.mxu0 0.0
    %272 = vmatpush1.msra.mxu0 %v154
    %273 = vmatprep.subr.mxu0 0.0
    %274 = vmatpush1.msra.mxu0 %v153
    %275 = vmatprep.subr.mxu0 0.0
    %276 = vmatpush1.msra.mxu0 %v152
    %277 = vmatprep.subr.mxu0 0.0
    %278 = vmatpush1.msra.mxu0 %v151
    %279 = vmatprep.subr.mxu0 0.0
    %280 = vmatpush1.msra.mxu0 %v150
    %281 = vmatprep.subr.mxu0 0.0
    %282 = vmatpush1.msra.mxu0 %v149
    %283 = vmatprep.subr.mxu0 0.0
    %284 = vmatpush1.msra.mxu0 %v148
    %285 = vmatprep.subr.mxu0 0.0
    %286 = vmatpush2.msra.mxu0 0.0
    %287 = vmatprep.subr.mxu0 0.0
    %288 = vmatpush2.msra.mxu0 0.0
    %289 = vmatprep.subr.mxu0 0.0
    %290 = vmatpush2.msra.mxu0 0.0
    %291 = vmatprep.subr.mxu0 0.0
    %292 = vmatpush2.msra.mxu0 0.0
    %293 = vmatprep.subr.mxu0 0.0
    %294 = vmatpush2.msra.mxu0 0.0
    %295 = vmatprep.subr.mxu0 0.0
    %296 = vmatpush2.msra.mxu0 0.0
    %297 = vmatprep.subr.mxu0 0.0
    %298 = vmatpush2.msra.mxu0 0.0
    %299 = vmatprep.subr.mxu0 0.0
    %300 = vmatpush2.msra.mxu0 0.0
    %301 = vmatprep.subr.mxu0 0.0
    %302 = vmatpush2.msra.mxu0 0.0
    %303 = vmatprep.subr.mxu0 0.0
    %304 = vmatpush2.msra.mxu0 0.0
    %305 = vmatprep.subr.mxu0 0.0
    %306 = vmatpush2.msra.mxu0 0.0
    %307 = vmatprep.subr.mxu0 0.0
    %308 = vmatpush2.msra.mxu0 0.0
    %309 = vmatprep.subr.mxu0 0.0
    %310 = vmatpush2.msra.mxu0 0.0
    %311 = vmatprep.subr.mxu0 0.0
    %312 = vmatpush2.msra.mxu0 0.0
    %313 = vmatprep.subr.mxu0 0.0
    %314 = vmatpush2.msra.mxu0 0.0
    %315 = vmatprep.subr.mxu0 0.0
    %316 = vmatpush2.msra.mxu0 0.0
    %317 = vmatprep.mubr.f32.mxu0 0.0
    %318 = vmatmul.mubr.f32.gmra.mxu0 %v164
    %v319 = vpop.f32.mrf.mxu0
    %v320 = vadd.f32 0.0, %v319
    %v321 = vpop.f32.mrf.mxu0
    %322 = vmatprep.mubr.f32.mxu0 0.0
    %323 = vmatmul.mubr.f32.gmra.mxu0 %v165
    %v324 = vpop.f32.mrf.mxu0
    %v325 = vadd.f32 0.0, %v324
    %v326 = vpop.f32.mrf.mxu0
    %327 = vmatprep.mubr.f32.mxu0 0.0
    %328 = vmatmul.mubr.f32.gmra.mxu0 %v166
    %v329 = vpop.f32.mrf.mxu0
    %v330 = vadd.f32 0.0, %v329
    %v331 = vpop.f32.mrf.mxu0
    %332 = vmatprep.mubr.f32.mxu0 0.0
    %333 = vmatmul.mubr.f32.gmra.mxu0 %v167
    %v334 = vpop.f32.mrf.mxu0
    %v335 = vadd.f32 0.0, %v334
    %v336 = vpop.f32.mrf.mxu0
    %337 = vdwg.mxu0
    %v338 = vmax.f32 %v235, 0.0
    %v339 = vmax.f32 %v240, 0.0
    %v340 = vmax.f32 %v245, 0.0
    %v341 = vmax.f32 %v250, 0.0
    %v342 = vadd.f32 %v338, 1e-06
    %v343 = vadd.f32 %v339, 1e-06
    %v344 = vadd.f32 %v340, 1e-06
    %v345 = vadd.f32 %v341, 1e-06
    %v346 = vmax.f32 %v320, 0.0
    %v347 = vmax.f32 %v325, 0.0
    %v348 = vmax.f32 %v330, 0.0
    %v349 = vmax.f32 %v335, 0.0
    %v350 = vadd.f32 %v346, 1e-06
    %v351 = vadd.f32 %v347, 1e-06
    %v352 = vadd.f32 %v348, 1e-06
    %v353 = vadd.f32 %v349, 1e-06
    %v354 = vmul.f32 %v342, %v350
    %v355 = vmul.f32 %v343, %v351
    %v356 = vmul.f32 %v344, %v352
    %v357 = vmul.f32 %v345, %v353
    %v358 = vadd.f32 %v354, %v355
    %v359 = vadd.f32 %v358, %v356
    %v360 = vadd.f32 %v359, %v357
    %v361 = vrot.slane %v360, 4
    %v362 = vadd.f32 %v360, %v361
    %v363 = vrot.slane %v362, 2
    %v364 = vadd.f32 %v362, %v363
    %v365 = vrot.slane %v364, 1
    %v366 = vadd.f32 %v364, %v365
    %v367 = vmul.f32 %v342, %v342
    %v368 = vmul.f32 %v343, %v343
    %v369 = vmul.f32 %v344, %v344
    %v370 = vmul.f32 %v345, %v345
    %v371 = vadd.f32 %v367, %v368
    %v372 = vadd.f32 %v371, %v369
    %v373 = vadd.f32 %v372, %v370
    %v374 = vrot.slane %v373, 4
    %v375 = vadd.f32 %v373, %v374
    %v376 = vrot.slane %v375, 2
    %v377 = vadd.f32 %v375, %v376
    %v378 = vrot.slane %v377, 1
    %v379 = vadd.f32 %v377, %v378
    %v380 = vmul.f32 %v350, %v350
    %v381 = vmul.f32 %v351, %v351
    %v382 = vmul.f32 %v352, %v352
    %v383 = vmul.f32 %v353, %v353
    %v384 = vadd.f32 %v380, %v381
    %v385 = vadd.f32 %v384, %v382
    %v386 = vadd.f32 %v385, %v383
    %v387 = vrot.slane %v386, 4
    %v388 = vadd.f32 %v386, %v387
    %v389 = vrot.slane %v388, 2
    %v390 = vadd.f32 %v388, %v389
    %v391 = vrot.slane %v390, 1
    %v392 = vadd.f32 %v390, %v391
    %v393 = vrsqrt.pop %v379
    %v394 = vmul.f32 %v366, %v393
    %v395 = vrsqrt.pop %v392
    %v396 = vmul.f32 %v394, %v395
    %397 = vst [vmem:[#allocation7] sm:$0x1] %v396
    // Predicated region
    $region22: #{tpu_custom_call.1} parent=1 // pred_check
      _
    $region23: #{tpu_custom_call.1} parent=1 // pred_check_branch
      %399 = sbr.rel (0) target = $region25
    $region24: #{tpu_custom_call.1} parent=1 // pred_region
      %s401 = ssub.s32 16, 16
      %402 = vsyncadd [#allocation4], %s401
      %s404 = sshll.u32 [#allocation7], 4
      %s405 = int_to_ptr.vmem [resolvable:$true] %s404
      %407 = dma.vmem_to_hbm [thread:$0]  %s405, 16, %s3, [#allocation4]
    $region25: #{tpu_custom_call.1} parent=1 // pred_fallthru
      _
    // Predicated region
    $region26: #{tpu_custom_call.1} parent=1 // pred_check
      _
    $region27: #{tpu_custom_call.1} parent=1 // pred_check_branch
      %409 = sbr.rel (0) target = $region29
    $region28: #{tpu_custom_call.1} parent=1 // pred_region
      %410 = dma.done [#allocation4], 16
    $region29: #{tpu_custom_call.1} parent=1 // pred_fallthru
      _
    %411 = vsyncpa [#allocation3], 1
    %412 = vsyncpa [#allocation6], 1
    %413 = vsyncpa [#allocation4], 1

</llo_original>
